<compile_context>
chip_gen: v6e
topology: v6e:2x2x1
jax: 0.10.0
libtpu: 0.0.40
codegen_flags: <defaults>
</compile_context>

<pallas_src>
import functools

import jax
import jax.numpy as jnp
from jax.experimental import pallas as pl
from jax.experimental.pallas import tpu as pltpu


# ---------------------------------------------------------------------------
# Hoisted (non-recurrent) matmul + bias: one whole-block MXU matmul.
# ---------------------------------------------------------------------------
def _matmul_bias_kernel(x_ref, w_ref, b_ref, o_ref):
    o_ref[...] = (jnp.dot(x_ref[...], w_ref[...],
                          preferred_element_type=jnp.float32)
                  + b_ref[...]).astype(o_ref.dtype)


def matmul_bias_pallas(x, w, b):
    """x: (M, K), w: (K, N), b: (1, N) -> (M, N) float32."""
    M = x.shape[0]
    N = w.shape[1]
    # TODO(synk): tile over M/N/K for production-sized GEMMs; whole-block is
    # optimal at these small shapes.
    return pl.pallas_call(
        _matmul_bias_kernel,
        out_shape=jax.ShapeDtypeStruct((M, N), jnp.float32),
    )(x, w, b)


def _batch_block(B):
    # Split the batch across TensorCores when it stays sublane-aligned (>=16
    # and divisible by 16); otherwise keep one block (toy sizes, B=2).
    if B % 16 == 0:
        return B // 2
    return B


# ---------------------------------------------------------------------------
# Encoder LSTM layer: single kernel invocation, fori_loop over time.
# Input-projection pre-gates gx = X @ W_ih + b are computed outside.
# ---------------------------------------------------------------------------
def _lstm_recurrent_kernel(hidden_dim, gx_ref, whh_ref,
                           out_ref, hout_ref, cout_ref):
    H = hidden_dim
    S = gx_ref.shape[0]
    Bb = gx_ref.shape[1]
    whh = whh_ref[...]                                  # (H, 4H), loaded once

    def step(t, carry):
        h, c = carry
        gates = gx_ref[t] + jnp.dot(h, whh, preferred_element_type=jnp.float32)
        i = jax.nn.sigmoid(gates[:, 0 * H:1 * H])
        f = jax.nn.sigmoid(gates[:, 1 * H:2 * H])
        g = jnp.tanh(gates[:, 2 * H:3 * H])
        o = jax.nn.sigmoid(gates[:, 3 * H:4 * H])
        c_new = f * c + i * g
        h_new = o * jnp.tanh(c_new)
        out_ref[t] = h_new.astype(out_ref.dtype)
        return h_new, c_new

    h0 = jnp.zeros((Bb, H), jnp.float32)
    c0 = jnp.zeros((Bb, H), jnp.float32)
    hT, cT = jax.lax.fori_loop(0, S, step, (h0, c0))
    hout_ref[...] = hT.astype(hout_ref.dtype)
    cout_ref[...] = cT.astype(cout_ref.dtype)


def lstm_recurrent_pallas(gx_tbg, w_hh_t, hidden_dim):
    """gx_tbg: (S, B, 4H) pre-gates (time-major). Returns (out (S,B,H), h_T, c_T)."""
    S, B, G = gx_tbg.shape
    H = hidden_dim
    bb = _batch_block(B)
    nb = B // bb
    kernel = functools.partial(_lstm_recurrent_kernel, H)
    out, h_f, c_f = pl.pallas_call(
        kernel,
        out_shape=(jax.ShapeDtypeStruct((S, B, H), jnp.float32),
                   jax.ShapeDtypeStruct((B, H), jnp.float32),
                   jax.ShapeDtypeStruct((B, H), jnp.float32)),
        grid_spec=pltpu.PrefetchScalarGridSpec(
            num_scalar_prefetch=0,
            grid=(nb,),
            in_specs=[pl.BlockSpec((S, bb, G), lambda b: (0, b, 0)),
                      pl.BlockSpec((H, G), lambda b: (0, 0))],
            out_specs=[pl.BlockSpec((S, bb, H), lambda b: (0, b, 0)),
                       pl.BlockSpec((bb, H), lambda b: (b, 0)),
                       pl.BlockSpec((bb, H), lambda b: (b, 0))]),
        compiler_params=pltpu.CompilerParams(dimension_semantics=("parallel",)),
    )(gx_tbg, w_hh_t)
    return out, h_f, c_f


# ---------------------------------------------------------------------------
# Decoder: single kernel invocation, fori_loop over target steps.
#   attention (MXU batched contractions) -> context
#   LSTMCell gates = gx[t] + context @ W_c + h @ W_h   (x-projection hoisted)
# Emits hidden states only; the FC head is hoisted out.
# ---------------------------------------------------------------------------
def _decoder_recurrent_kernel(hidden_dim, gx_ref, enc_ref, h0_ref, c0_ref,
                              wc_ref, wh_ref, hout_ref):
    H = hidden_dim
    Tm1 = gx_ref.shape[0]
    enc = enc_ref[...]                                  # (Bb, S, H), loaded once
    wc = wc_ref[...]
    wh = wh_ref[...]

    def step(t, carry):
        h, c = carry
        # DotAttention on the MXU (flash-style batched contractions).
        q = h[:, None, :]                               # (Bb, 1, H)
        scores = jnp.einsum('bqd,bkd->bqk', q, enc,
                            preferred_element_type=jnp.float32)     # (Bb,1,S)
        scores = scores - jnp.max(scores, axis=-1, keepdims=True)
        e = jnp.exp(scores)
        attn = e * pl.reciprocal(jnp.sum(e, axis=-1, keepdims=True), approx=True)
        ctx = jnp.sum(jnp.einsum('bqk,bkd->bqd', attn, enc,
                                 preferred_element_type=jnp.float32),
                      axis=1)                            # (Bb, H)
        # LSTMCell update (x @ W_x + bias already folded into gx).
        gates = (gx_ref[t]
                 + jnp.dot(ctx, wc, preferred_element_type=jnp.float32)
                 + jnp.dot(h, wh, preferred_element_type=jnp.float32))
        i = jax.nn.sigmoid(gates[:, 0 * H:1 * H])
        f = jax.nn.sigmoid(gates[:, 1 * H:2 * H])
        g = jnp.tanh(gates[:, 2 * H:3 * H])
        o = jax.nn.sigmoid(gates[:, 3 * H:4 * H])
        c_new = f * c + i * g
        h_new = o * jnp.tanh(c_new)
        hout_ref[t] = h_new.astype(hout_ref.dtype)
        return h_new, c_new

    jax.lax.fori_loop(0, Tm1, step, (h0_ref[...], c0_ref[...]))


def decoder_recurrent_pallas(gx_dec, enc_bsh, h0, c0, w_c, w_h, hidden_dim):
    """gx_dec: (T-1, B, 4H); enc_bsh: (B, S, H). Returns hidden states (T-1, B, H)."""
    Tm1, B, G = gx_dec.shape
    S = enc_bsh.shape[1]
    H = hidden_dim
    bb = _batch_block(B)
    nb = B // bb
    kernel = functools.partial(_decoder_recurrent_kernel, H)
    return pl.pallas_call(
        kernel,
        out_shape=jax.ShapeDtypeStruct((Tm1, B, H), jnp.float32),
        grid_spec=pltpu.PrefetchScalarGridSpec(
            num_scalar_prefetch=0,
            grid=(nb,),
            in_specs=[pl.BlockSpec((Tm1, bb, G), lambda b: (0, b, 0)),
                      pl.BlockSpec((bb, S, H), lambda b: (b, 0, 0)),
                      pl.BlockSpec((bb, H), lambda b: (b, 0)),
                      pl.BlockSpec((bb, H), lambda b: (b, 0)),
                      pl.BlockSpec((H, G), lambda b: (0, 0)),
                      pl.BlockSpec((H, G), lambda b: (0, 0))],
            out_specs=pl.BlockSpec((Tm1, bb, H), lambda b: (0, b, 0))),
        compiler_params=pltpu.CompilerParams(dimension_semantics=("parallel",)),
    )(gx_dec, enc_bsh, h0, c0, w_c, w_h)


# ---------------------------------------------------------------------------
# Full forward pass (embedding gather is wrapper glue; matmuls & recurrences
# are Pallas).
# ---------------------------------------------------------------------------
def seq2seq_forward(params, src, tgt):
    emb = params["embed"]
    H = params["hidden_dim"]
    B = src.shape[0]

    # --- encoder (time-major end-to-end: one transpose in, one out) ---
    layer_in = jnp.transpose(jnp.take(emb, src, axis=0), (1, 0, 2))   # (S, B, E)
    h_last = c_last = None
    for (w_ih_t, w_hh_t, b) in params["enc_layers"]:
        S, Bd, Ein = layer_in.shape
        # hoisted input projection for all timesteps: one MXU-efficient matmul
        gx = matmul_bias_pallas(layer_in.reshape(S * Bd, Ein), w_ih_t, b)
        gx = gx.reshape(S, Bd, 4 * H)
        layer_in, h_last, c_last = lstm_recurrent_pallas(gx, w_hh_t, H)
    enc_out_bsh = jnp.transpose(layer_in, (1, 0, 2))                  # (B, S, H)

    # --- decoder ---
    dec_emb = jnp.take(emb, tgt[:, :-1], axis=0)                      # (B, T-1, E)
    Tm1 = dec_emb.shape[1]
    dec_tbe = jnp.transpose(dec_emb, (1, 0, 2))                       # (T-1, B, E)
    # hoisted decoder input projection (+ fused bias) for all steps
    gx_dec = matmul_bias_pallas(dec_tbe.reshape(Tm1 * B, -1),
                                params["dec_w_x"], params["dec_b"])
    gx_dec = gx_dec.reshape(Tm1, B, 4 * H)
    h_dec = decoder_recurrent_pallas(gx_dec, enc_out_bsh, h_last, c_last,
                                     params["dec_w_c"], params["dec_w_h"], H)

    # --- hoisted FC head: one big matmul over all decoder steps ---
    logits = matmul_bias_pallas(h_dec.reshape(Tm1 * B, H),
                                params["fc_w"], params["fc_b"])
    V = logits.shape[1]
    return jnp.transpose(logits.reshape(Tm1, B, V), (1, 0, 2))        # (B, T-1, V)


# ---------------------------------------------------------------------------
# Pure-JAX reference (same math) for a correctness check.
# ---------------------------------------------------------------------------
def reference_forward(params, src, tgt):
    emb = params["embed"]
    H = params["hidden_dim"]
    B = src.shape[0]
    layer_in = emb[src]
    h_last = c_last = None
    for (w_ih_t, w_hh_t, b) in params["enc_layers"]:
        S = layer_in.shape[1]
        h = jnp.zeros((B, H), jnp.float32)
        c = jnp.zeros((B, H), jnp.float32)
        outs = []
        for t in range(S):
            gates = layer_in[:, t] @ w_ih_t + h @ w_hh_t + b
            i = jax.nn.sigmoid(gates[:, :H])
            f = jax.nn.sigmoid(gates[:, H:2 * H])
            g = jnp.tanh(gates[:, 2 * H:3 * H])
            o = jax.nn.sigmoid(gates[:, 3 * H:4 * H])
            c = f * c + i * g
            h = o * jnp.tanh(c)
            outs.append(h)
        layer_in = jnp.stack(outs, axis=1)
        h_last, c_last = h, c
    enc_out = layer_in
    h_t, c_t = h_last, c_last
    dec_input = emb[tgt[:, 0]]
    outputs = []
    for t in range(1, tgt.shape[1]):
        scores = jnp.einsum("bsh,bh->bs", enc_out, h_t)
        attn = jax.nn.softmax(scores, axis=1)
        context = jnp.einsum("bs,bsh->bh", attn, enc_out)
        gates = (dec_input @ params["dec_w_x"] + context @ params["dec_w_c"]
                 + h_t @ params["dec_w_h"] + params["dec_b"])
        i = jax.nn.sigmoid(gates[:, :H])
        f = jax.nn.sigmoid(gates[:, H:2 * H])
        g = jnp.tanh(gates[:, 2 * H:3 * H])
        o = jax.nn.sigmoid(gates[:, 3 * H:4 * H])
        c_t = f * c_t + i * g
        h_t = o * jnp.tanh(c_t)
        outputs.append(h_t @ params["fc_w"] + params["fc_b"])
        dec_input = emb[tgt[:, t]]
    return jnp.stack(outputs, axis=1)


# ---------------------------------------------------------------------------
# Deterministic parameter init (shapes match the nn.Module __init__).
# NOTE: when porting real PyTorch weights, bias must be b_ih + b_hh and the
# LSTMCell weight_ih must be split column-consistently into dec_w_x / dec_w_c.
# ---------------------------------------------------------------------------
def init_params(key, vocab_size, embed_dim, hidden_dim, num_layers, pad_id):
    keys = jax.random.split(key, 3 * num_layers + 8)
    scale = 0.1
    kidx = 0

    def nrm(shape):
        nonlocal kidx
        k = keys[kidx]
        kidx += 1
        return (jax.random.normal(k, shape, jnp.float32) * scale)

    embed = nrm((vocab_size, embed_dim)).at[pad_id].set(0.0)   # padding_idx row = 0

    enc_layers = []
    in_dim = embed_dim
    for _ in range(num_layers):
        w_ih_t = nrm((in_dim, 4 * hidden_dim))
        w_hh_t = nrm((hidden_dim, 4 * hidden_dim))
        b = nrm((1, 4 * hidden_dim))     # b_ih + b_hh fused
        enc_layers.append((w_ih_t, w_hh_t, b))
        in_dim = hidden_dim

    params = {
        "embed": embed,
        "enc_layers": enc_layers,
        # LSTMCell weight_ih has input embed_dim + hidden_dim; split into x / context halves
        "dec_w_x": nrm((embed_dim, 4 * hidden_dim)),
        "dec_w_c": nrm((hidden_dim, 4 * hidden_dim)),
        "dec_w_h": nrm((hidden_dim, 4 * hidden_dim)),
        "dec_b": nrm((1, 4 * hidden_dim)),
        "fc_w": nrm((hidden_dim, vocab_size)),
        "fc_b": nrm((1, vocab_size)),
        "hidden_dim": hidden_dim,
    }
    return params


if __name__ == "__main__":
    B, S_SRC, T_TGT = 2, 8, 6
    VOCAB, EMBED, HIDDEN, NUM_LAYERS, PAD_ID = 32, 16, 32, 2, 0

    key = jax.random.PRNGKey(0)
    pkey, skey, tkey = jax.random.split(key, 3)
    params = init_params(pkey, VOCAB, EMBED, HIDDEN, NUM_LAYERS, PAD_ID)
    src = jax.random.randint(skey, (B, S_SRC), 0, VOCAB, dtype=jnp.int32)
    tgt = jax.random.randint(tkey, (B, T_TGT), 0, VOCAB, dtype=jnp.int32)

    out = seq2seq_forward(params, src, tgt)
    out = jax.block_until_ready(out)
    assert out.shape == (B, T_TGT - 1, VOCAB), out.shape

    ref = reference_forward(params, src, tgt)
    err = float(jnp.max(jnp.abs(out - ref)))
    if err < 1e-2:
        print("KERNEL_OK")
    else:
        print(f"MISMATCH max_abs_err={err}")
</pallas_src>

<mosaic_0001>
module attributes {stable_mosaic.version = 11 : i64} {
  func.func @_matmul_bias_kernel(%arg0: memref<16x16xf32, #tpu.memory_space<vmem>>, %arg1: memref<16x128xf32, #tpu.memory_space<vmem>>, %arg2: memref<1x128xf32, #tpu.memory_space<vmem>>, %arg3: memref<16x128xf32, #tpu.memory_space<vmem>>) attributes {dimension_semantics = [], scalar_prefetch = 0 : i64, scratch_operands = 0 : i64, tpu.core_type = #tpu.core_type<tc>} {
    %c0 = arith.constant 0 : index
    %c0_0 = arith.constant 0 : index
    %0 = vector.load %arg0[%c0, %c0_0] : memref<16x16xf32, #tpu.memory_space<vmem>>, vector<16x16xf32>
    %c0_1 = arith.constant 0 : index
    %c0_2 = arith.constant 0 : index
    %1 = vector.load %arg1[%c0_1, %c0_2] : memref<16x128xf32, #tpu.memory_space<vmem>>, vector<16x128xf32>
    %cst = arith.constant dense<0.000000e+00> : vector<16x128xf32>
    %2 = tpu.matmul %0, %1, %cst {dimension_numbers = #tpu.dot_dimension_numbers<[1], [0], [0], [1], [0, 0, 1, 1], [], []>} : vector<16x16xf32>, vector<16x128xf32>, vector<16x128xf32> -> vector<16x128xf32>
    %c0_3 = arith.constant 0 : index
    %c0_4 = arith.constant 0 : index
    %3 = vector.load %arg2[%c0_3, %c0_4] : memref<1x128xf32, #tpu.memory_space<vmem>>, vector<1x128xf32>
    %4 = vector.broadcast %3 : vector<1x128xf32> to vector<16x128xf32>
    %5 = arith.addf %2, %4 : vector<16x128xf32>
    %c0_5 = arith.constant 0 : index
    %c0_6 = arith.constant 0 : index
    %6 = vector.load %arg3[%c0_5, %c0_6] : memref<16x128xf32, #tpu.memory_space<vmem>>, vector<16x128xf32>
    tpu.vector_store %arg3[%c0_5, %c0_6], %5 {strides = array<i32>} : memref<16x128xf32, #tpu.memory_space<vmem>>, vector<16x128xf32>,
    return
  }
}

</mosaic_0001>

<llo_original>
// kernel: tpu_custom_call.1
$region0: #{tpu_custom_call.1}
  #allocation0 [shape = 'u32[]', space=smem, size = 0x4, offset = 0x4, fixed_abs, tag = 'smem constant byte address 0x4 - core index']
  #allocation1 [shape = 'u32[144,128]{1,0:T(1,128)}', space=vmem, size = 0x12000, scoped, tag = 'internal scratch']
  %s0 = inlined_call_operand.hbm [shape: f32[16,16], index: 0, kind: input, shape index: {}]
  %s1 = inlined_call_operand.hbm [shape: f32[16,128], index: 1, kind: input, shape index: {}]
  %s2 = inlined_call_operand.vmem [shape: f32[1,128], index: 2, kind: input, shape index: {}]
  %s3 = inlined_call_operand.hbm [shape: f32[16,128], index: 3, kind: output, shape index: {}]
  %s4 = sld [smem:[#allocation0]]
  $region30: #{tpu_custom_call.1} parent=0
    _
  %s6 = ssub.s32 1, %s4
  %s7 = scalar_select 0, %s6, %s4
  $region1: #{tpu_custom_call.1} parent=0
    #allocation2 [shape = 'u8[8192]{0}', space=vmem, size = 0x2000, scoped, tag = 'input window, operand 0, single buffered']
    #allocation3 [shape = 's32[1]{0}', space=sflag, size = 0x4, scoped, tag = 'scoped memory for tpu_custom_call.1']
    #allocation4 [shape = 's32[1]{0}', space=sflag, size = 0x4, scoped, tag = 'scoped memory for tpu_custom_call.1']
    #allocation5 [shape = 'u8[8192]{0}', space=vmem, size = 0x2000, scoped, tag = 'input window, operand 1, single buffered']
    #allocation6 [shape = 's32[1]{0}', space=sflag, size = 0x4, scoped, tag = 'scoped memory for tpu_custom_call.1']
    #allocation7 [shape = 'u8[8192]{0}', space=vmem, size = 0x2000, scoped, tag = 'output window, operand 0, single buffered']
    %8 = vsyncpa [#allocation3], 0
    %9 = vsyncpa [#allocation6], 0
    %10 = vsyncpa [#allocation4], 0
    // Predicated region
    $region2: #{tpu_custom_call.1} parent=1 // pred_check
      _
    $region3: #{tpu_custom_call.1} parent=1 // pred_check_branch
      %12 = sbr.rel (0) target = $region5
    $region4: #{tpu_custom_call.1} parent=1 // pred_region
      %s14 = ssub.s32 256, 256
      %15 = vsyncadd [#allocation3], %s14
      %s16 = sshll.u32 [#allocation2], 4
      %s17 = int_to_ptr.vmem [resolvable:$true] %s16
      %22 = dma.hbm_to_vmem [thread:$0]  %s0, 256, %s17, [#allocation3], 128, 128, 8
    $region5: #{tpu_custom_call.1} parent=1 // pred_fallthru
      _
    // Predicated region
    $region6: #{tpu_custom_call.1} parent=1 // pred_check
      _
    $region7: #{tpu_custom_call.1} parent=1 // pred_check_branch
      %24 = sbr.rel (0) target = $region9
    $region8: #{tpu_custom_call.1} parent=1 // pred_region
      %s26 = ssub.s32 256, 256
      %27 = vsyncadd [#allocation6], %s26
      %s28 = sshll.u32 [#allocation5], 4
      %s29 = int_to_ptr.vmem [resolvable:$true] %s28
      %34 = dma.hbm_to_vmem [thread:$0]  %s1, 256, %s29, [#allocation6], 128, 128, 8
    $region9: #{tpu_custom_call.1} parent=1 // pred_fallthru
      _
    // Predicated region
    $region10: #{tpu_custom_call.1} parent=1 // pred_check
      _
    $region11: #{tpu_custom_call.1} parent=1 // pred_check_branch
      %36 = sbr.rel (0) target = $region13
    $region12: #{tpu_custom_call.1} parent=1 // pred_region
      _
    $region13: #{tpu_custom_call.1} parent=1 // pred_fallthru
      _
    // Predicated region
    $region14: #{tpu_custom_call.1} parent=1 // pred_check
      _
    $region15: #{tpu_custom_call.1} parent=1 // pred_check_branch
      %38 = sbr.rel (0) target = $region17
    $region16: #{tpu_custom_call.1} parent=1 // pred_region
      %39 = dma.done [#allocation3], 256
    $region17: #{tpu_custom_call.1} parent=1 // pred_fallthru
      _
    // Predicated region
    $region18: #{tpu_custom_call.1} parent=1 // pred_check
      _
    $region19: #{tpu_custom_call.1} parent=1 // pred_check_branch
      %41 = sbr.rel (0) target = $region21
    $region20: #{tpu_custom_call.1} parent=1 // pred_region
      %42 = dma.done [#allocation6], 256
    $region21: #{tpu_custom_call.1} parent=1 // pred_fallthru
      _
    %v43 = vld [vmem:[#allocation2] sm:$0xff]
    %v44 = vld [vmem:[#allocation2 + $0x8] sm:$0xff]
    %v45 = vld [vmem:[#allocation5] sm:$0xff]
    %v46 = vld [vmem:[#allocation5 + $0x8] sm:$0xff]
    %v47 = vld [vmem:[%s2] sm:$0x1]
    %v49 = vlaneseq
    %v50 = vshrl.u32 %v49, 7
    %v51 = vsub.s32 0, %v50
    %v52 = vrot.slane %v47, %v51
    %vm54 = vcmask 130048
    %v56 = vsel %vm54, %v43, 0
    %v59 = vsel %vm54, %v44, 0
    %61 = vmatprep.subr.mxu0 0.0
    %62 = vmatpush1.msra.mxu0 0.0
    %63 = vmatprep.subr.mxu0 0.0
    %64 = vmatpush1.msra.mxu0 0.0
    %65 = vmatprep.subr.mxu0 0.0
    %66 = vmatpush1.msra.mxu0 0.0
    %67 = vmatprep.subr.mxu0 0.0
    %68 = vmatpush1.msra.mxu0 0.0
    %69 = vmatprep.subr.mxu0 0.0
    %70 = vmatpush1.msra.mxu0 0.0
    %71 = vmatprep.subr.mxu0 0.0
    %72 = vmatpush1.msra.mxu0 0.0
    %73 = vmatprep.subr.mxu0 0.0
    %74 = vmatpush1.msra.mxu0 0.0
    %75 = vmatprep.subr.mxu0 0.0
    %76 = vmatpush1.msra.mxu0 0.0
    %77 = vmatprep.subr.mxu0 0.0
    %78 = vmatpush1.msra.mxu0 0.0
    %79 = vmatprep.subr.mxu0 0.0
    %80 = vmatpush1.msra.mxu0 0.0
    %81 = vmatprep.subr.mxu0 0.0
    %82 = vmatpush1.msra.mxu0 0.0
    %83 = vmatprep.subr.mxu0 0.0
    %84 = vmatpush1.msra.mxu0 0.0
    %85 = vmatprep.subr.mxu0 0.0
    %86 = vmatpush1.msra.mxu0 0.0
    %87 = vmatprep.subr.mxu0 0.0
    %88 = vmatpush1.msra.mxu0 0.0
    %89 = vmatprep.subr.mxu0 0.0
    %90 = vmatpush1.msra.mxu0 %v46
    %91 = vmatprep.subr.mxu0 0.0
    %92 = vmatpush1.msra.mxu0 %v45
    %93 = vmatprep.subr.mxu0 0.0
    %94 = vmatpush2.msra.mxu0 0.0
    %95 = vmatprep.subr.mxu0 0.0
    %96 = vmatpush2.msra.mxu0 0.0
    %97 = vmatprep.subr.mxu0 0.0
    %98 = vmatpush2.msra.mxu0 0.0
    %99 = vmatprep.subr.mxu0 0.0
    %100 = vmatpush2.msra.mxu0 0.0
    %101 = vmatprep.subr.mxu0 0.0
    %102 = vmatpush2.msra.mxu0 0.0
    %103 = vmatprep.subr.mxu0 0.0
    %104 = vmatpush2.msra.mxu0 0.0
    %105 = vmatprep.subr.mxu0 0.0
    %106 = vmatpush2.msra.mxu0 0.0
    %107 = vmatprep.subr.mxu0 0.0
    %108 = vmatpush2.msra.mxu0 0.0
    %109 = vmatprep.subr.mxu0 0.0
    %110 = vmatpush2.msra.mxu0 0.0
    %111 = vmatprep.subr.mxu0 0.0
    %112 = vmatpush2.msra.mxu0 0.0
    %113 = vmatprep.subr.mxu0 0.0
    %114 = vmatpush2.msra.mxu0 0.0
    %115 = vmatprep.subr.mxu0 0.0
    %116 = vmatpush2.msra.mxu0 0.0
    %117 = vmatprep.subr.mxu0 0.0
    %118 = vmatpush2.msra.mxu0 0.0
    %119 = vmatprep.subr.mxu0 0.0
    %120 = vmatpush2.msra.mxu0 0.0
    %121 = vmatprep.subr.mxu0 0.0
    %122 = vmatpush2.msra.mxu0 0.0
    %123 = vmatprep.subr.mxu0 0.0
    %124 = vmatpush2.msra.mxu0 0.0
    %125 = vmatprep.mubr.f32.mxu0 0.0
    %126 = vmatmul.mubr.f32.gmra.mxu0 %v56
    %v127 = vpop.f32.mrf.mxu0
    %v128 = vadd.f32 %v52, %v127
    %v129 = vpop.f32.mrf.mxu0
    %130 = vmatprep.mubr.f32.mxu0 0.0
    %131 = vmatmul.mubr.f32.gmra.mxu0 %v59
    %v132 = vpop.f32.mrf.mxu0
    %v133 = vadd.f32 %v52, %v132
    %v134 = vpop.f32.mrf.mxu0
    %135 = vdwg.mxu0
    %136 = vst [vmem:[#allocation7] sm:$0xff] %v128
    %137 = vst [vmem:[#allocation7 + $0x8] sm:$0xff] %v133
    // Predicated region
    $region22: #{tpu_custom_call.1} parent=1 // pred_check
      _
    $region23: #{tpu_custom_call.1} parent=1 // pred_check_branch
      %139 = sbr.rel (0) target = $region25
    $region24: #{tpu_custom_call.1} parent=1 // pred_region
      %s141 = ssub.s32 256, 256
      %142 = vsyncadd [#allocation4], %s141
      %s143 = sshll.u32 [#allocation7], 4
      %s144 = int_to_ptr.vmem [resolvable:$true] %s143
      %149 = dma.vmem_to_hbm [thread:$0]  %s144, 256, %s3, [#allocation4], 128, 128, 8
    $region25: #{tpu_custom_call.1} parent=1 // pred_fallthru
      _
    // Predicated region
    $region26: #{tpu_custom_call.1} parent=1 // pred_check
      _
    $region27: #{tpu_custom_call.1} parent=1 // pred_check_branch
      %151 = sbr.rel (0) target = $region29
    $region28: #{tpu_custom_call.1} parent=1 // pred_region
      %152 = dma.done [#allocation4], 256
    $region29: #{tpu_custom_call.1} parent=1 // pred_fallthru
      _
    %153 = vsyncpa [#allocation3], 1
    %154 = vsyncpa [#allocation6], 1
    %155 = vsyncpa [#allocation4], 1

</llo_original>
